<compile_context>
chip_gen: v7x
topology: tpu7x:2x2x1
jax: 0.10.0
libtpu: 0.0.40
codegen_flags: <defaults>
</compile_context>

<pallas_src>
import jax
import jax.numpy as jnp
from jax.experimental import pallas as pl
from jax.experimental.pallas import tpu as pltpu

_LANES = 128
_SUBLANES = 8
_MAX_ROWS_PER_BLOCK = 1024  # 1024 x 128 x 4B = 512 KiB per buffer


def _ptmodule_kernel(x_ref, o_ref):
    # x_ref / o_ref: (1, TR, 128) VMEM tiles for batch index b = program_id(0)
    b = pl.program_id(0)
    denom = (b + 1).astype(jnp.float32)
    inv = 1.0 / denom          # scalar
    scale = 3.0 * inv          # scalar
    offset = 6.0 * inv         # scalar: (x + 2) * 3 / d == x*(3/d) + (6/d)
    o_ref[...] = jnp.maximum(x_ref[...] * scale + offset, 0.0)


def ptmodule_forward(x):
    """x: (B, C, H, W) float32 array (NCHW, same as the PyTorch module)."""
    B, C, H, W = x.shape
    N = C * H * W

    # Pad flattened per-batch size to a multiple of 8*128 so the lane-dense
    # (rows, 128) view has rows % 8 == 0. Padding is sliced off afterwards.
    chunk = _SUBLANES * _LANES
    N_pad = ((N + chunk - 1) // chunk) * chunk
    rows = N_pad // _LANES

    x_flat = x.reshape(B, N)
    if N_pad != N:
        x_flat = jnp.pad(x_flat, ((0, 0), (0, N_pad - N)))
    x3 = x_flat.reshape(B, rows, _LANES)

    tr = min(rows, _MAX_ROWS_PER_BLOCK)  # rows is a multiple of 8, so tr is too
    grid = (B, pl.cdiv(rows, tr))

    out3 = pl.pallas_call(
        _ptmodule_kernel,
        out_shape=jax.ShapeDtypeStruct((B, rows, _LANES), x.dtype),
        grid_spec=pltpu.PrefetchScalarGridSpec(
            num_scalar_prefetch=0,
            grid=grid,
            in_specs=[pl.BlockSpec((1, tr, _LANES), lambda b, r: (b, r, 0))],
            out_specs=pl.BlockSpec((1, tr, _LANES), lambda b, r: (b, r, 0)),
        ),
        compiler_params=pltpu.CompilerParams(
            dimension_semantics=("parallel", "parallel"),
        ),
    )(x3)

    out_flat = out3.reshape(B, N_pad)[:, :N]
    return out_flat.reshape(B, C, H, W)


def ptmodule_reference(x):
    # Pure-JAX reference mirroring the PyTorch semantics (divide last).
    y = (x + 2.0) * 3.0
    B = x.shape[0]
    divisors = (jnp.arange(B, dtype=jnp.float32) + 1.0).reshape(B, 1, 1, 1)
    y = y / divisors
    return jnp.maximum(y, 0.0)


if __name__ == "__main__":
    key = jax.random.PRNGKey(0)
    x = jax.random.normal(key, (2, 4, 16, 16), dtype=jnp.float32)

    out = ptmodule_forward(x)
    out = jax.block_until_ready(out)

    ref = ptmodule_reference(x)
    assert out.shape == x.shape
    # Affine refactor (x*scale + offset) changes rounding slightly vs divide-last.
    assert jnp.allclose(out, ref, atol=1e-5, rtol=1e-5), "mismatch vs reference"

    print("KERNEL_OK")
</pallas_src>

<mosaic_0001>
module attributes {stable_mosaic.version = 11 : i64} {
  func.func @_ptmodule_kernel(%arg0: i32, %arg1: i32, %arg2: memref<1x8x128xf32, #tpu.memory_space<vmem>>, %arg3: memref<1x8x128xf32, #tpu.memory_space<vmem>>) attributes {dimension_semantics = [#tpu.dimension_semantics<parallel>, #tpu.dimension_semantics<parallel>], iteration_bounds = array<i64: 2, 1>, scalar_prefetch = 0 : i64, scratch_operands = 0 : i64, tpu.core_type = #tpu.core_type<tc>, window_params = [{transform_indices = @transform_0, window_bounds = array<i64: 1, 8, 128>}, {transform_indices = @transform_1, window_bounds = array<i64: 1, 8, 128>}]} {
    %c1_i32 = arith.constant 1 : i32
    %0 = arith.addi %arg0, %c1_i32 : i32
    %1 = arith.sitofp %0 : i32 to f32
    %cst = arith.constant 1.000000e+00 : f32
    %2 = arith.divf %cst, %1 : f32
    %cst_0 = arith.constant 3.000000e+00 : f32
    %3 = arith.mulf %cst_0, %2 : f32
    %cst_1 = arith.constant 6.000000e+00 : f32
    %4 = arith.mulf %cst_1, %2 : f32
    %c0 = arith.constant 0 : index
    %c0_2 = arith.constant 0 : index
    %c0_3 = arith.constant 0 : index
    %5 = vector.load %arg2[%c0, %c0_2, %c0_3] : memref<1x8x128xf32, #tpu.memory_space<vmem>>, vector<1x8x128xf32>
    %6 = vector.broadcast %3 : f32 to vector<1x8x128xf32>
    %7 = arith.mulf %5, %6 : vector<1x8x128xf32>
    %8 = vector.broadcast %4 : f32 to vector<1x8x128xf32>
    %9 = arith.addf %7, %8 : vector<1x8x128xf32>
    %cst_4 = arith.constant 0.000000e+00 : f32
    %10 = vector.broadcast %cst_4 : f32 to vector<1x8x128xf32>
    %11 = arith.maximumf %9, %10 : vector<1x8x128xf32>
    %c0_5 = arith.constant 0 : index
    %c0_6 = arith.constant 0 : index
    %c0_7 = arith.constant 0 : index
    %12 = vector.load %arg3[%c0_5, %c0_6, %c0_7] : memref<1x8x128xf32, #tpu.memory_space<vmem>>, vector<1x8x128xf32>
    tpu.vector_store %arg3[%c0_5, %c0_6, %c0_7], %11 {strides = array<i32>} : memref<1x8x128xf32, #tpu.memory_space<vmem>>, vector<1x8x128xf32>,
    return
  }
  func.func @transform_0(%arg0: i32, %arg1: i32) -> (i32, i32, i32) {
    %c0_i32 = arith.constant 0 : i32
    %c0_i32_0 = arith.constant 0 : i32
    return %arg0, %arg1, %c0_i32 : i32, i32, i32
  }
  func.func @transform_1(%arg0: i32, %arg1: i32) -> (i32, i32, i32) {
    %c0_i32 = arith.constant 0 : i32
    %c0_i32_0 = arith.constant 0 : i32
    return %arg0, %arg1, %c0_i32 : i32, i32, i32
  }
}

</mosaic_0001>

<llo_original>
// kernel: tpu_custom_call.1
$region0: #{tpu_custom_call.1}
  #allocation0 [shape = 'u32[]', space=smem, size = 0x4, offset = 0x4, fixed_abs, tag = 'smem constant byte address 0x4 - core index']
  #allocation1 [shape = 'u32[144,128]{1,0:T(1,128)}', space=vmem, size = 0x12000, scoped, tag = 'internal scratch']
  %s0 = inlined_call_operand.hbm [shape: f32[2,8,128], index: 0, kind: input, shape index: {}]
  %s1 = inlined_call_operand.hbm [shape: f32[2,8,128], index: 1, kind: output, shape index: {}]
  %s2 = sld [smem:[#allocation0]]
  $region41: #{tpu_custom_call.1} parent=0
    _
  %s4 = ssub.s32 1, %s2
  %s5 = scalar_select 0, %s4, %s2
  $region1: #{tpu_custom_call.1} parent=0
    #allocation2 [shape = 'u8[8192]{0}', space=vmem, size = 0x2000, scoped, tag = 'input window, operand 0']
    #allocation3 [shape = 's32[2]{0}', space=sflag, size = 0x8, scoped, tag = 'scoped memory for tpu_custom_call.1']
    #allocation4 [shape = 's32[2]{0}', space=sflag, size = 0x8, scoped, tag = 'scoped memory for tpu_custom_call.1']
    #allocation5 [shape = 'u8[8192]{0}', space=vmem, size = 0x2000, scoped, tag = 'output window, operand 0']
    %6 = vsyncpa [#allocation3], 0
    %s7 = scalar_lea.sflag [#allocation3], 1
    %8 = vsyncpa %s7, 0
    %9 = vsyncpa [#allocation4], 0
    %s10 = scalar_lea.sflag [#allocation4], 1
    %11 = vsyncpa %s10, 0
    loop: start=0, step=1, limit=4
    $region2: #{tpu_custom_call.1} parent=1 // loop_pre_header
      _
    $region3: #{tpu_custom_call.1} parent=1 // loop_header
      %s13 = sphi 0, %s17
      %p14 = scmp.ge.s32.totalorder %s13, 4
      %s20 = sphi 0, %s32
      %s21 = sphi 0, %s28
      %s22 = sphi 0, %s20
      %s23 = sphi 0, %s21
      %s24 = sphi 0, %s22
      %s25 = sphi 0, %s23
      %s37 = sphi 0, %s39
      %s40 = sphi 0, %s37
      %s41 = sphi 0, %s40
      %s57 = sphi 0, %s41
      %s65 = sphi 0, %s67
      %s68 = sphi 0, %s65
      %s69 = sphi 0, %s68
      %s85 = sphi 0, %s69
    $region4: #{tpu_custom_call.1} parent=1 // loop_header_branch
      %16 = sbr.rel (%p14) target = $region8
    $region5: #{tpu_custom_call.1} parent=1 // loop_body
      %s18 = ssub.s32 %s13, 1
      %s19 = ssub.s32 %s13, 2
      %s26 = sadd.s32 1, %s21
      %p27 = scmp.ge.s32.totalorder %s26, 1
      %s28 = scalar_select %p27, 0, %s26
      %s29 = sadd.s32 1, %s20
      %s30 = scalar_select %p27, %s29, %s20
      %p31 = scmp.ge.s32.totalorder %s30, 2
      %s32 = scalar_select %p31, 0, %s30
      %s33 = ssub.s32 %s20, %s32
      %s34 = ssub.s32 %s21, %s28
      %s35 = sor.u32 %s33, %s34
      %p36 = scmp.eq.s32.totalorder %s35, 0
      %s38 = sadd.s32 %s37, 1
      %s39 = scalar_select %p36, %s37, %s38
      %p42 = pneg %p36
      %p43 = scmp.eq.s32.totalorder %s13, 1
      %p44 = por %p42, %p43
      %p45 = scmp.ne.s32.totalorder %s37, %s40
      %p46 = scmp.eq.s32.totalorder %s13, 0
      %p47 = por %p45, %p46
      %p48 = scmp.ne.s32.totalorder %s37, %s40
      %p49 = scmp.eq.s32.totalorder %s18, 1
      %p50 = por %p48, %p49
      %p51 = scmp.ne.s32.totalorder %s40, %s41
      %p52 = scmp.eq.s32.totalorder %s18, 0
      %p53 = por %p51, %p52
      %p54 = scmp.ne.s32.totalorder %s40, %s41
      %p55 = scmp.eq.s32.totalorder %s19, 1
      %p56 = por %p54, %p55
      %p58 = scmp.ne.s32.totalorder %s41, %s57
      %p59 = scmp.eq.s32.totalorder %s19, 0
      %p60 = por %p58, %p59
      %s61 = ssub.s32 %s20, %s32
      %s62 = ssub.s32 %s21, %s28
      %s63 = sor.u32 %s61, %s62
      %p64 = scmp.eq.s32.totalorder %s63, 0
      %s66 = sadd.s32 %s65, 1
      %s67 = scalar_select %p64, %s65, %s66
      %p70 = pneg %p64
      %p71 = scmp.eq.s32.totalorder %s13, 1
      %p72 = por %p70, %p71
      %p73 = scmp.ne.s32.totalorder %s65, %s68
      %p74 = scmp.eq.s32.totalorder %s13, 0
      %p75 = por %p73, %p74
      %p76 = scmp.ne.s32.totalorder %s65, %s68
      %p77 = scmp.eq.s32.totalorder %s18, 1
      %p78 = por %p76, %p77
      %p79 = scmp.ne.s32.totalorder %s68, %s69
      %p80 = scmp.eq.s32.totalorder %s18, 0
      %p81 = por %p79, %p80
      %p82 = scmp.ne.s32.totalorder %s68, %s69
      %p83 = scmp.eq.s32.totalorder %s19, 1
      %p84 = por %p82, %p83
      %p86 = scmp.ne.s32.totalorder %s69, %s85
      %p87 = scmp.eq.s32.totalorder %s19, 0
      %p88 = por %p86, %p87
      %p89 = scmp.le.s32.totalorder 1, %s13
      %p90 = scmp.lt.s32.totalorder %s13, 3
      %p91 = pnand %p89, %p90
      %p92 = pneg %p91
      // Predicated region
      $region9: #{tpu_custom_call.1} parent=5 // pred_check
        _
      $region10: #{tpu_custom_call.1} parent=5 // pred_check_branch
        %94 = sbr.rel (%p91) target = $region12
      $region11: #{tpu_custom_call.1} parent=5 // pred_region
        %s95 = ssub.s32 %s13, 1
      $region12: #{tpu_custom_call.1} parent=5 // pred_fallthru
        _
      %p96 = scmp.lt.s32.totalorder %s13, 2
      // Predicated region
      $region13: #{tpu_custom_call.1} parent=5 // pred_check
        %p97 = pneg %p96
      $region14: #{tpu_custom_call.1} parent=5 // pred_check_branch
        %99 = sbr.rel (%p97) target = $region16
      $region15: #{tpu_custom_call.1} parent=5 // pred_region
        // Predicated region
        $region17: #{tpu_custom_call.1} parent=15 // pred_check
          %p100 = pneg %p47
        $region18: #{tpu_custom_call.1} parent=15 // pred_check_branch
          %102 = sbr.rel (%p100) target = $region20
        $region19: #{tpu_custom_call.1} parent=15 // pred_region
          %s103 = sand.u32 %s37, 1
          %s104 = scalar_lea.sflag [#allocation3], %s103
          %s105 = sand.u32 %s37, 1
          %s106 = smul.addr %s105, 8
          %s107 = scalar_lea.vmem [#allocation2], %s106
          %s109 = ssub.s32 128, 128
          %110 = vsyncadd %s104, %s109
          %s111 = sadd.s32 %s21, %s20
          %s112 = smul.addr %s111, 128
          %s113 = scalar_lea.hbm %s0, %s112
          %s115 = sshll.u32 %s107, 4
          %s116 = int_to_ptr.vmem [resolvable:$true] %s115
          %118 = dma.hbm_to_vmem [thread:$0]  %s113, 128, %s116, %s104
        $region20: #{tpu_custom_call.1} parent=15 // pred_fallthru
          _
      $region16: #{tpu_custom_call.1} parent=5 // pred_fallthru
        _
      %p119 = scmp.le.s32.totalorder 1, %s13
      %p120 = scmp.lt.s32.totalorder %s13, 3
      %p121 = pnand %p119, %p120
      %p122 = pneg %p121
      // Predicated region
      $region21: #{tpu_custom_call.1} parent=5 // pred_check
        _
      $region22: #{tpu_custom_call.1} parent=5 // pred_check_branch
        %124 = sbr.rel (%p121) target = $region24
      $region23: #{tpu_custom_call.1} parent=5 // pred_region
        %s125 = ssub.s32 %s13, 1
        %s126 = sand.u32 %s40, 1
        %s127 = scalar_lea.sflag [#allocation3], %s126
        %s128 = sand.u32 %s40, 1
        %s129 = smul.addr %s128, 8
        %s130 = scalar_lea.vmem [#allocation2], %s129
        // Predicated region
        $region25: #{tpu_custom_call.1} parent=23 // pred_check
          %p131 = pneg %p53
        $region26: #{tpu_custom_call.1} parent=23 // pred_check_branch
          %133 = sbr.rel (%p131) target = $region28
        $region27: #{tpu_custom_call.1} parent=23 // pred_region
          %134 = dma.done %s127, 128
        $region28: #{tpu_custom_call.1} parent=23 // pred_fallthru
          _
        %s135 = sand.u32 %s40, 1
        %s136 = scalar_lea.sflag [#allocation3], %s135
        %s137 = sand.u32 %s40, 1
        %s138 = smul.addr %s137, 8
        %s139 = scalar_lea.vmem [#allocation2], %s138
        %p140 = pneg %p53
        %p141 = pneg %p50
        %p142 = pneg %p81
        %p143 = pneg %p78
        %s144 = sand.u32 %s68, 1
        %s145 = scalar_lea.sflag [#allocation4], %s144
        %s146 = sand.u32 %s68, 1
        %s147 = smul.addr %s146, 8
        %s148 = scalar_lea.vmem [#allocation5], %s147
        %s149 = sadd.s32 %s22, 1
        %s150 = scvt.s32.f32 %s149
        %v151 = vstv %s150
        %v152 = vrcp.pop %v151
        %s153 = vtos %v152
        %s154 = smul.f32 %s153, 3.0
        %s155 = smul.f32 %s153, 6.0
        %v156 = vld [vmem:[%s130] sm:$0xff]
        %v157 = vstv %s154
        %v158 = vmul.f32 %v156, %v157
        %v159 = vstv %s155
        %v160 = vadd.f32 %v158, %v159
        %v161 = vmax.f32 %v160, 0.0
        %162 = vst [vmem:[%s148] sm:$0xff] %v161
        %s163 = sand.u32 %s68, 1
        %s164 = scalar_lea.sflag [#allocation4], %s163
        %s165 = sand.u32 %s68, 1
        %s166 = smul.addr %s165, 8
        %s167 = scalar_lea.vmem [#allocation5], %s166
        // Predicated region
        $region29: #{tpu_custom_call.1} parent=23 // pred_check
          %p168 = pneg %p78
        $region30: #{tpu_custom_call.1} parent=23 // pred_check_branch
          %170 = sbr.rel (%p168) target = $region32
        $region31: #{tpu_custom_call.1} parent=23 // pred_region
          %s172 = ssub.s32 128, 128
          %173 = vsyncadd %s164, %s172
          %s174 = sadd.s32 %s23, %s22
          %s175 = smul.addr %s174, 128
          %s176 = scalar_lea.hbm %s1, %s175
          %s178 = sshll.u32 %s167, 4
          %s179 = int_to_ptr.vmem [resolvable:$true] %s178
          %181 = dma.vmem_to_hbm [thread:$0]  %s179, 128, %s176, %s164
        $region32: #{tpu_custom_call.1} parent=23 // pred_fallthru
          _
      $region24: #{tpu_custom_call.1} parent=5 // pred_fallthru
        _
      %p182 = scmp.le.s32.totalorder 2, %s13
      // Predicated region
      $region33: #{tpu_custom_call.1} parent=5 // pred_check
        %p183 = pneg %p182
      $region34: #{tpu_custom_call.1} parent=5 // pred_check_branch
        %185 = sbr.rel (%p183) target = $region36
      $region35: #{tpu_custom_call.1} parent=5 // pred_region
        %s186 = ssub.s32 %s13, 2
        // Predicated region
        $region37: #{tpu_custom_call.1} parent=35 // pred_check
          %p187 = pneg %p84
        $region38: #{tpu_custom_call.1} parent=35 // pred_check_branch
          %189 = sbr.rel (%p187) target = $region40
        $region39: #{tpu_custom_call.1} parent=35 // pred_region
          %s190 = sand.u32 %s69, 1
          %s191 = scalar_lea.sflag [#allocation4], %s190
          %s192 = sand.u32 %s69, 1
          %s193 = smul.addr %s192, 8
          %s194 = scalar_lea.vmem [#allocation5], %s193
          %195 = dma.done %s191, 128
        $region40: #{tpu_custom_call.1} parent=35 // pred_fallthru
          _
      $region36: #{tpu_custom_call.1} parent=5 // pred_fallthru
        _
    $region6: #{tpu_custom_call.1} parent=1 // loop_footer
      %s17 = sadd.s32 1, %s13
    $region7: #{tpu_custom_call.1} parent=1 // loop_footer_branch
      %12 = sbr.rel target = $region3
    $region8: #{tpu_custom_call.1} parent=1 // loop_exit
      _
    %196 = vsyncpa [#allocation3], 1
    %s197 = scalar_lea.sflag [#allocation3], 1
    %198 = vsyncpa %s197, 1
    %199 = vsyncpa [#allocation4], 1
    %s200 = scalar_lea.sflag [#allocation4], 1
    %201 = vsyncpa %s200, 1

</llo_original>
